<compile_context>
chip_gen: v7x
topology: tpu7x:2x2x1
jax: 0.10.0
libtpu: 0.0.40
codegen_flags: <defaults>
</compile_context>

<pallas_src>
import functools

import jax
import jax.numpy as jnp
from jax import lax
from jax.experimental import pallas as pl
from jax.experimental.pallas import tpu as pltpu


def _round_up(x, m):
    return ((x + m - 1) // m) * m


def _choose_tile(s, target, mult=16):
    """Largest tile <= target that is a multiple of `mult` (>= mult)."""
    t = min(target, _round_up(s, mult))
    return max(mult, _round_up(t, mult))


def _vmem_bytes(tq, tk, input_dim, dqk_pad, dv_pad, out_bytes):
    """Approximate VMEM footprint: double-buffered blocks + scratch."""
    bf = 2  # bf16
    blocks = 2 * (tq * input_dim * bf          # query tile (bf16)
                  + tk * dqk_pad * bf          # pre-projected K tile (bf16)
                  + tk * dv_pad * bf           # pre-projected V tile (bf16)
                  + input_dim * dqk_pad * bf   # Wq^T (bf16)
                  + tq * dv_pad * out_bytes)   # output tile
    scratch = (tq * dqk_pad * bf               # projected Q scratch (bf16)
               + 2 * tq * 128 * 4              # m, l (lane-padded f32)
               + tq * dv_pad * 4)              # f32 accumulator
    return blocks + scratch


def _attention_head_kernel(q_ref, k_ref, v_ref, wq_ref, o_ref,
                           q_sc, m_sc, l_sc, acc_sc,
                           *, sk_valid, tk, mask_keys):
    ki = pl.program_id(2)

    @pl.when(ki == 0)
    def _init():
        # Q projection once per (batch, q-tile). 1/sqrt(key_dim) is already
        # folded into Wq by the wrapper; operands are bf16, accumulation f32.
        q = jnp.dot(q_ref[...], wq_ref[...], preferred_element_type=jnp.float32)
        q_sc[...] = q.astype(jnp.bfloat16)
        m_sc[...] = jnp.full(m_sc.shape, -jnp.inf, dtype=m_sc.dtype)
        l_sc[...] = jnp.zeros(l_sc.shape, dtype=l_sc.dtype)
        acc_sc[...] = jnp.zeros(acc_sc.shape, dtype=acc_sc.dtype)

    # Scores: contract last dims of Q and (pre-projected) K — no K transpose.
    s = lax.dot_general(q_sc[...], k_ref[...],
                        dimension_numbers=(((1,), (1,)), ((), ())),
                        preferred_element_type=jnp.float32)

    if mask_keys:
        # Only traced when the key sequence was zero-padded to a tile multiple.
        col = lax.broadcasted_iota(jnp.int32, s.shape, 1) + ki * tk
        s = jnp.where(col < sk_valid, s, -jnp.inf)

    # Online (flash) softmax; statistics kept in f32.
    m_prev = m_sc[...]
    m_new = jnp.maximum(m_prev, jnp.max(s, axis=-1, keepdims=True))
    alpha = jnp.exp(m_prev - m_new)
    p = jnp.exp(s - m_new)
    l_sc[...] = alpha * l_sc[...] + jnp.sum(p, axis=-1, keepdims=True)
    acc_sc[...] = alpha * acc_sc[...] + jnp.dot(
        p.astype(jnp.bfloat16), v_ref[...], preferred_element_type=jnp.float32)
    m_sc[...] = m_new

    @pl.when(ki == pl.num_programs(2) - 1)
    def _finalize():
        inv_l = pl.reciprocal(l_sc[...], approx=True)  # EUP slot, ~free
        o_ref[...] = (acc_sc[...] * inv_l).astype(o_ref.dtype)


def attention_head(query, key, value, wq, wk, wv, *,
                   tq_target=256, tk_target=512, out_dtype=None,
                   vmem_tile_budget=28 * 1024 * 1024):
    """Pallas implementation of AttentionHead.forward.

    query: (B, Sq, input_dim), key/value: (B, Sk, input_dim)
    wq: (query_dim, input_dim), wk: (key_dim, input_dim), wv: (value_dim, input_dim)
    returns: (B, Sq, value_dim)
    """
    B, Sq, input_dim = query.shape
    _, Sk, _ = key.shape
    query_dim, key_dim, value_dim = wq.shape[0], wk.shape[0], wv.shape[0]
    assert query_dim == key_dim, "q/k projection dims must match for bmm"
    out_dtype = query.dtype if out_dtype is None else out_dtype
    out_bytes = jnp.dtype(out_dtype).itemsize

    scale = float(key_dim) ** 0.5

    # Lane-dense projection widths (zero padding → exact zeros in the output).
    dqk_pad = _round_up(query_dim, 128)
    dv_pad = _round_up(value_dim, 128)

    # Linear weights → (in, out); fold 1/scale into Wq; pad; cast to bf16.
    wq_t = (jnp.zeros((input_dim, dqk_pad), jnp.float32)
            .at[:, :query_dim].set(wq.T.astype(jnp.float32) / scale)
            .astype(jnp.bfloat16))
    wk_t = (jnp.zeros((input_dim, dqk_pad), jnp.float32)
            .at[:, :key_dim].set(wk.T.astype(jnp.float32))
            .astype(jnp.bfloat16))
    wv_t = (jnp.zeros((input_dim, dv_pad), jnp.float32)
            .at[:, :value_dim].set(wv.T.astype(jnp.float32))
            .astype(jnp.bfloat16))

    # Cast activations once in the wrapper → half-width DMA everywhere.
    q_bf = query.astype(jnp.bfloat16)

    # Hoist K / V projections out of the flash loop (done once per sequence,
    # not once per q-tile).  bf16 operands, f32 accumulation, bf16 result.
    k_proj = jnp.einsum("bsi,io->bso", key.astype(jnp.bfloat16), wk_t,
                        preferred_element_type=jnp.float32).astype(jnp.bfloat16)
    v_proj = jnp.einsum("bsi,io->bso", value.astype(jnp.bfloat16), wv_t,
                        preferred_element_type=jnp.float32).astype(jnp.bfloat16)

    # Tile selection: multiples of 16 sublanes, shrunk to fit the VMEM budget
    # (conservative for the 16/32 MiB scoped defaults; plenty under v7x 64 MiB).
    tq = _choose_tile(Sq, tq_target)
    tk = _choose_tile(Sk, tk_target)
    while _vmem_bytes(tq, tk, input_dim, dqk_pad, dv_pad, out_bytes) > vmem_tile_budget:
        if tk > 16:
            new_tk = max(16, _round_up(tk // 2, 16))
            if new_tk == tk:
                break
            tk = new_tk
        elif tq > 16:
            new_tq = max(16, _round_up(tq // 2, 16))
            if new_tq == tq:
                break
            tq = new_tq
        else:
            break

    # Megacore-awareness: make sure the "parallel" extents give both cores work.
    if B == 1 and _round_up(Sq, tq) // tq < 2 and tq >= 32:
        tq = max(16, _round_up(tq // 2, 16))

    Sq_pad = _round_up(Sq, tq)
    Sk_pad = _round_up(Sk, tk)
    mask_keys = Sk_pad != Sk

    # Zero-pad sequences to tile multiples (padded keys are masked in-kernel;
    # padded query rows are simply sliced off at the end).
    if Sq_pad != Sq:
        q_bf = jnp.pad(q_bf, ((0, 0), (0, Sq_pad - Sq), (0, 0)))
    if mask_keys:
        k_proj = jnp.pad(k_proj, ((0, 0), (0, Sk_pad - Sk), (0, 0)))
        v_proj = jnp.pad(v_proj, ((0, 0), (0, Sk_pad - Sk), (0, 0)))

    nq = Sq_pad // tq
    nk = Sk_pad // tk

    needed = _vmem_bytes(tq, tk, input_dim, dqk_pad, dv_pad, out_bytes)
    vmem_limit = int(min(max(needed + (8 << 20), 32 << 20), 48 << 20))

    kernel = functools.partial(_attention_head_kernel,
                               sk_valid=Sk, tk=tk, mask_keys=mask_keys)

    out_padded = pl.pallas_call(
        kernel,
        out_shape=jax.ShapeDtypeStruct((B, Sq_pad, dv_pad), out_dtype),
        grid_spec=pltpu.PrefetchScalarGridSpec(
            num_scalar_prefetch=0,
            grid=(B, nq, nk),
            in_specs=[
                pl.BlockSpec((pl.Squeezed(), tq, input_dim),
                             lambda b, qi, ki: (b, qi, 0)),      # query (bf16)
                pl.BlockSpec((pl.Squeezed(), tk, dqk_pad),
                             lambda b, qi, ki: (b, ki, 0)),      # K proj (bf16)
                pl.BlockSpec((pl.Squeezed(), tk, dv_pad),
                             lambda b, qi, ki: (b, ki, 0)),      # V proj (bf16)
                pl.BlockSpec((input_dim, dqk_pad),
                             lambda b, qi, ki: (0, 0)),          # Wq^T / scale
            ],
            out_specs=pl.BlockSpec((pl.Squeezed(), tq, dv_pad),
                                   lambda b, qi, ki: (b, qi, 0)),
            scratch_shapes=[
                pltpu.VMEM((tq, dqk_pad), jnp.bfloat16),  # projected (scaled) Q
                pltpu.VMEM((tq, 1), jnp.float32),         # running max m
                pltpu.VMEM((tq, 1), jnp.float32),         # running sum l
                pltpu.VMEM((tq, dv_pad), jnp.float32),    # output accumulator
            ]),
        compiler_params=pltpu.CompilerParams(
            dimension_semantics=("parallel", "parallel", "arbitrary"),
            vmem_limit_bytes=vmem_limit),
    )(q_bf, k_proj, v_proj, wq_t)

    # Drop sequence and lane padding (padding columns are exact zeros).
    return out_padded[:, :Sq, :value_dim]


def _reference(query, key, value, wq, wk, wv):
    q = query @ wq.T
    k = key @ wk.T
    v = value @ wv.T
    s = jnp.einsum("bqd,bkd->bqk", q, k) / (k.shape[-1] ** 0.5)
    p = jax.nn.softmax(s, axis=-1)
    return jnp.einsum("bqk,bkd->bqd", p, v)


if __name__ == "__main__":
    B, Sq, Sk = 2, 8, 8
    input_dim, query_dim, key_dim, value_dim = 32, 16, 16, 16

    rng = jax.random.PRNGKey(0)
    kq, kk, kv, kwq, kwk, kwv = jax.random.split(rng, 6)

    query = jax.random.normal(kq, (B, Sq, input_dim), dtype=jnp.float32)
    key_ = jax.random.normal(kk, (B, Sk, input_dim), dtype=jnp.float32)
    value = jax.random.normal(kv, (B, Sk, input_dim), dtype=jnp.float32)

    # Deterministic "Linear" weights, PyTorch layout (out_dim, in_dim).
    wq = jax.random.normal(kwq, (query_dim, input_dim), dtype=jnp.float32) * 0.1
    wk = jax.random.normal(kwk, (key_dim, input_dim), dtype=jnp.float32) * 0.1
    wv = jax.random.normal(kwv, (value_dim, input_dim), dtype=jnp.float32) * 0.1

    out = attention_head(query, key_, value, wq, wk, wv)
    out = jax.block_until_ready(out)

    ref = _reference(query, key_, value, wq, wk, wv)
    assert out.shape == (B, Sq, value_dim)
    # bf16 activations/operands + approx reciprocal → looser tolerance than f32.
    assert jnp.allclose(out, ref, atol=2.5e-2, rtol=2.5e-2), "mismatch vs reference"

    print("KERNEL_OK")
</pallas_src>

<mosaic_0001>
module attributes {stable_mosaic.version = 11 : i64} {
  func.func @_attention_head_kernel(%arg0: i32, %arg1: i32, %arg2: i32, %arg3: memref<1x16x32xbf16, #tpu.memory_space<vmem>>, %arg4: memref<1x16x128xbf16, #tpu.memory_space<vmem>>, %arg5: memref<1x16x128xbf16, #tpu.memory_space<vmem>>, %arg6: memref<32x128xbf16, #tpu.memory_space<vmem>>, %arg7: memref<1x16x128xf32, #tpu.memory_space<vmem>>, %arg8: memref<16x128xbf16, #tpu.memory_space<vmem>>, %arg9: memref<16x1xf32, #tpu.memory_space<vmem>>, %arg10: memref<16x1xf32, #tpu.memory_space<vmem>>, %arg11: memref<16x128xf32, #tpu.memory_space<vmem>>) attributes {dimension_semantics = [#tpu.dimension_semantics<parallel>, #tpu.dimension_semantics<parallel>, #tpu.dimension_semantics<arbitrary>], iteration_bounds = array<i64: 2, 1, 1>, scalar_prefetch = 0 : i64, scratch_operands = 4 : i64, tpu.core_type = #tpu.core_type<tc>, window_params = [{transform_indices = @transform_0, window_bounds = array<i64: 1, 16, 32>}, {transform_indices = @transform_1, window_bounds = array<i64: 1, 16, 128>}, {transform_indices = @transform_2, window_bounds = array<i64: 1, 16, 128>}, {pipeline_mode = #tpu.pipeline_mode<synchronous>, transform_indices = @transform_3, window_bounds = array<i64: 32, 128>}, {transform_indices = @transform_4, window_bounds = array<i64: 1, 16, 128>}]} {
    %c0_i32 = arith.constant 0 : i32
    %0 = arith.cmpi eq, %arg2, %c0_i32 : i32
    %1 = arith.extui %0 : i1 to i32
    %c0_i32_0 = arith.constant 0 : i32
    %2 = arith.cmpi ne, %1, %c0_i32_0 : i32
    scf.if %2 {
      %c0_26 = arith.constant 0 : index
      %c0_27 = arith.constant 0 : index
      %c0_28 = arith.constant 0 : index
      %43 = vector.load %arg3[%c0_26, %c0_27, %c0_28] : memref<1x16x32xbf16, #tpu.memory_space<vmem>>, vector<1x16x32xbf16>
      %44 = vector.shape_cast %43 : vector<1x16x32xbf16> to vector<16x32xbf16>
      %c0_29 = arith.constant 0 : index
      %c0_30 = arith.constant 0 : index
      %45 = vector.load %arg6[%c0_29, %c0_30] : memref<32x128xbf16, #tpu.memory_space<vmem>>, vector<32x128xbf16>
      %cst_31 = arith.constant dense<0.000000e+00> : vector<16x128xf32>
      %46 = tpu.matmul %44, %45, %cst_31 {dimension_numbers = #tpu.dot_dimension_numbers<[1], [0], [0], [1], [0, 0, 1, 1], [], []>} : vector<16x32xbf16>, vector<32x128xbf16>, vector<16x128xf32> -> vector<16x128xf32>
      %47 = arith.truncf %46 : vector<16x128xf32> to vector<16x128xbf16>
      %c0_32 = arith.constant 0 : index
      %c0_33 = arith.constant 0 : index
      %48 = vector.load %arg8[%c0_32, %c0_33] : memref<16x128xbf16, #tpu.memory_space<vmem>>, vector<16x128xbf16>
      tpu.vector_store %arg8[%c0_32, %c0_33], %47 {strides = array<i32>} : memref<16x128xbf16, #tpu.memory_space<vmem>>, vector<16x128xbf16>,
      %cst_34 = arith.constant 0xFF800000 : f32
      %49 = vector.broadcast %cst_34 : f32 to vector<16x1xf32>
      %c0_35 = arith.constant 0 : index
      %c0_36 = arith.constant 0 : index
      %50 = vector.load %arg9[%c0_35, %c0_36] : memref<16x1xf32, #tpu.memory_space<vmem>>, vector<16x1xf32>
      tpu.vector_store %arg9[%c0_35, %c0_36], %49 {strides = array<i32>} : memref<16x1xf32, #tpu.memory_space<vmem>>, vector<16x1xf32>,
      %cst_37 = arith.constant 0.000000e+00 : f32
      %51 = vector.broadcast %cst_37 : f32 to vector<16x1xf32>
      %c0_38 = arith.constant 0 : index
      %c0_39 = arith.constant 0 : index
      %52 = vector.load %arg10[%c0_38, %c0_39] : memref<16x1xf32, #tpu.memory_space<vmem>>, vector<16x1xf32>
      tpu.vector_store %arg10[%c0_38, %c0_39], %51 {strides = array<i32>} : memref<16x1xf32, #tpu.memory_space<vmem>>, vector<16x1xf32>,
      %cst_40 = arith.constant 0.000000e+00 : f32
      %53 = vector.broadcast %cst_40 : f32 to vector<16x128xf32>
      %c0_41 = arith.constant 0 : index
      %c0_42 = arith.constant 0 : index
      %54 = vector.load %arg11[%c0_41, %c0_42] : memref<16x128xf32, #tpu.memory_space<vmem>>, vector<16x128xf32>
      tpu.vector_store %arg11[%c0_41, %c0_42], %53 {strides = array<i32>} : memref<16x128xf32, #tpu.memory_space<vmem>>, vector<16x128xf32>,
    } else {
    }
    %c0 = arith.constant 0 : index
    %c0_1 = arith.constant 0 : index
    %3 = vector.load %arg8[%c0, %c0_1] : memref<16x128xbf16, #tpu.memory_space<vmem>>, vector<16x128xbf16>
    %c0_2 = arith.constant 0 : index
    %c0_3 = arith.constant 0 : index
    %c0_4 = arith.constant 0 : index
    %4 = vector.load %arg4[%c0_2, %c0_3, %c0_4] : memref<1x16x128xbf16, #tpu.memory_space<vmem>>, vector<1x16x128xbf16>
    %5 = vector.shape_cast %4 : vector<1x16x128xbf16> to vector<16x128xbf16>
    %cst = arith.constant dense<0.000000e+00> : vector<16x16xf32>
    %6 = tpu.matmul %3, %5, %cst {dimension_numbers = #tpu.dot_dimension_numbers<[1], [1], [0], [0], [0, 0, 1, 0], [], []>} : vector<16x128xbf16>, vector<16x128xbf16>, vector<16x16xf32> -> vector<16x16xf32>
    %7 = tpu.iota {dimensions = array<i32: 1>} : vector<16x16xi32>
    %c16_i32 = arith.constant 16 : i32
    %8 = arith.muli %arg2, %c16_i32 : i32
    %9 = vector.broadcast %8 : i32 to vector<16x16xi32>
    %10 = arith.addi %7, %9 : vector<16x16xi32>
    %c8_i32 = arith.constant 8 : i32
    %11 = vector.broadcast %c8_i32 : i32 to vector<16x16xi32>
    %12 = arith.cmpi slt, %10, %11 : vector<16x16xi32>
    %cst_5 = arith.constant 0xFF800000 : f32
    %13 = vector.broadcast %cst_5 : f32 to vector<16x16xf32>
    %14 = arith.select %12, %6, %13 : vector<16x16xi1>, vector<16x16xf32>
    %c0_6 = arith.constant 0 : index
    %c0_7 = arith.constant 0 : index
    %15 = vector.load %arg9[%c0_6, %c0_7] : memref<16x1xf32, #tpu.memory_space<vmem>>, vector<16x1xf32>
    %cst_8 = arith.constant dense<0xFF800000> : vector<16xf32>
    %16 = vector.multi_reduction <maximumf>, %14, %cst_8 [1] : vector<16x16xf32> to vector<16xf32>
    %17 = vector.shape_cast %16 : vector<16xf32> to vector<16x1xf32>
    %18 = arith.maximumf %15, %17 : vector<16x1xf32>
    %19 = arith.subf %15, %18 : vector<16x1xf32>
    %20 = math.exp %19 : vector<16x1xf32>
    %21 = vector.broadcast %18 : vector<16x1xf32> to vector<16x16xf32>
    %22 = arith.subf %14, %21 : vector<16x16xf32>
    %23 = math.exp %22 : vector<16x16xf32>
    %c0_9 = arith.constant 0 : index
    %c0_10 = arith.constant 0 : index
    %24 = vector.load %arg10[%c0_9, %c0_10] : memref<16x1xf32, #tpu.memory_space<vmem>>, vector<16x1xf32>
    %25 = arith.mulf %20, %24 : vector<16x1xf32>
    %cst_11 = arith.constant dense<0.000000e+00> : vector<16xf32>
    %26 = vector.multi_reduction <add>, %23, %cst_11 [1] : vector<16x16xf32> to vector<16xf32>
    %27 = vector.shape_cast %26 : vector<16xf32> to vector<16x1xf32>
    %28 = arith.addf %25, %27 : vector<16x1xf32>
    %c0_12 = arith.constant 0 : index
    %c0_13 = arith.constant 0 : index
    %29 = vector.load %arg10[%c0_12, %c0_13] : memref<16x1xf32, #tpu.memory_space<vmem>>, vector<16x1xf32>
    tpu.vector_store %arg10[%c0_12, %c0_13], %28 {strides = array<i32>} : memref<16x1xf32, #tpu.memory_space<vmem>>, vector<16x1xf32>,
    %c0_14 = arith.constant 0 : index
    %c0_15 = arith.constant 0 : index
    %30 = vector.load %arg11[%c0_14, %c0_15] : memref<16x128xf32, #tpu.memory_space<vmem>>, vector<16x128xf32>
    %31 = vector.broadcast %20 : vector<16x1xf32> to vector<16x128xf32>
    %32 = arith.mulf %31, %30 : vector<16x128xf32>
    %33 = arith.truncf %23 : vector<16x16xf32> to vector<16x16xbf16>
    %c0_16 = arith.constant 0 : index
    %c0_17 = arith.constant 0 : index
    %c0_18 = arith.constant 0 : index
    %34 = vector.load %arg5[%c0_16, %c0_17, %c0_18] : memref<1x16x128xbf16, #tpu.memory_space<vmem>>, vector<1x16x128xbf16>
    %35 = vector.shape_cast %34 : vector<1x16x128xbf16> to vector<16x128xbf16>
    %cst_19 = arith.constant dense<0.000000e+00> : vector<16x128xf32>
    %36 = tpu.matmul %33, %35, %cst_19 {dimension_numbers = #tpu.dot_dimension_numbers<[1], [0], [0], [1], [0, 0, 1, 1], [], []>} : vector<16x16xbf16>, vector<16x128xbf16>, vector<16x128xf32> -> vector<16x128xf32>
    %37 = arith.addf %32, %36 : vector<16x128xf32>
    %c0_20 = arith.constant 0 : index
    %c0_21 = arith.constant 0 : index
    %38 = vector.load %arg11[%c0_20, %c0_21] : memref<16x128xf32, #tpu.memory_space<vmem>>, vector<16x128xf32>
    tpu.vector_store %arg11[%c0_20, %c0_21], %37 {strides = array<i32>} : memref<16x128xf32, #tpu.memory_space<vmem>>, vector<16x128xf32>,
    %c0_22 = arith.constant 0 : index
    %c0_23 = arith.constant 0 : index
    %39 = vector.load %arg9[%c0_22, %c0_23] : memref<16x1xf32, #tpu.memory_space<vmem>>, vector<16x1xf32>
    tpu.vector_store %arg9[%c0_22, %c0_23], %18 {strides = array<i32>} : memref<16x1xf32, #tpu.memory_space<vmem>>, vector<16x1xf32>,
    %c0_i32_24 = arith.constant 0 : i32
    %40 = arith.cmpi eq, %arg2, %c0_i32_24 : i32
    %41 = arith.extui %40 : i1 to i32
    %c0_i32_25 = arith.constant 0 : i32
    %42 = arith.cmpi ne, %41, %c0_i32_25 : i32
    scf.if %42 {
      %c0_26 = arith.constant 0 : index
      %c0_27 = arith.constant 0 : index
      %43 = vector.load %arg10[%c0_26, %c0_27] : memref<16x1xf32, #tpu.memory_space<vmem>>, vector<16x1xf32>
      %44 = tpu.reciprocal %43 {approx = true} : vector<16x1xf32> -> vector<16x1xf32>
      %c0_28 = arith.constant 0 : index
      %c0_29 = arith.constant 0 : index
      %45 = vector.load %arg11[%c0_28, %c0_29] : memref<16x128xf32, #tpu.memory_space<vmem>>, vector<16x128xf32>
      %46 = vector.broadcast %44 : vector<16x1xf32> to vector<16x128xf32>
      %47 = arith.mulf %45, %46 : vector<16x128xf32>
      %c0_30 = arith.constant 0 : index
      %c0_31 = arith.constant 0 : index
      %c0_32 = arith.constant 0 : index
      %48 = vector.load %arg7[%c0_30, %c0_31, %c0_32] : memref<1x16x128xf32, #tpu.memory_space<vmem>>, vector<1x16x128xf32>
      %49 = vector.shape_cast %48 : vector<1x16x128xf32> to vector<16x128xf32>
      %50 = vector.shape_cast %47 : vector<16x128xf32> to vector<1x16x128xf32>
      tpu.vector_store %arg7[%c0_30, %c0_31, %c0_32], %50 {strides = array<i32>} : memref<1x16x128xf32, #tpu.memory_space<vmem>>, vector<1x16x128xf32>,
    } else {
    }
    return
  }
  func.func @transform_0(%arg0: i32, %arg1: i32, %arg2: i32) -> (i32, i32, i32) {
    %c0_i32 = arith.constant 0 : i32
    %c0_i32_0 = arith.constant 0 : i32
    return %arg0, %arg1, %c0_i32 : i32, i32, i32
  }
  func.func @transform_1(%arg0: i32, %arg1: i32, %arg2: i32) -> (i32, i32, i32) {
    %c0_i32 = arith.constant 0 : i32
    %c0_i32_0 = arith.constant 0 : i32
    return %arg0, %arg2, %c0_i32 : i32, i32, i32
  }
  func.func @transform_2(%arg0: i32, %arg1: i32, %arg2: i32) -> (i32, i32, i32) {
    %c0_i32 = arith.constant 0 : i32
    %c0_i32_0 = arith.constant 0 : i32
    return %arg0, %arg2, %c0_i32 : i32, i32, i32
  }
  func.func @transform_3(%arg0: i32, %arg1: i32, %arg2: i32) -> (i32, i32) {
    %c0_i32 = arith.constant 0 : i32
    %c0_i32_0 = arith.constant 0 : i32
    %c0_i32_1 = arith.constant 0 : i32
    return %c0_i32, %c0_i32_0 : i32, i32
  }
  func.func @transform_4(%arg0: i32, %arg1: i32, %arg2: i32) -> (i32, i32, i32) {
    %c0_i32 = arith.constant 0 : i32
    %c0_i32_0 = arith.constant 0 : i32
    return %arg0, %arg1, %c0_i32 : i32, i32, i32
  }
}

</mosaic_0001>

<llo_original>
// kernel: tpu_custom_call.1
$region0: #{tpu_custom_call.1}
  #allocation0 [shape = 'u32[]', space=smem, size = 0x4, offset = 0x4, fixed_abs, tag = 'smem constant byte address 0x4 - core index']
  #allocation1 [shape = 'u32[144,128]{1,0:T(1,128)}', space=vmem, size = 0x12000, scoped, tag = 'internal scratch']
  #allocation2 [shape = 'bf16[16,128]{1,0:T(16,128)(2,1)}', space=vmem, size = 0x1000, scoped, tag = 'scratch operand']
  #allocation3 [shape = 'f32[16,1]{1,0:T(8,128)}', space=vmem, size = 0x2000, scoped, tag = 'scratch operand']
  #allocation4 [shape = 'f32[16,1]{1,0:T(8,128)}', space=vmem, size = 0x2000, scoped, tag = 'scratch operand']
  #allocation5 [shape = 'f32[16,128]{1,0:T(8,128)}', space=vmem, size = 0x2000, scoped, tag = 'scratch operand']
  %s0 = inlined_call_operand.hbm [shape: bf16[2,16,32], index: 0, kind: input, shape index: {}]
  %s1 = inlined_call_operand.hbm [shape: bf16[2,16,128], index: 1, kind: input, shape index: {}]
  %s2 = inlined_call_operand.hbm [shape: bf16[2,16,128], index: 2, kind: input, shape index: {}]
  %s3 = inlined_call_operand.hbm [shape: bf16[32,128], index: 3, kind: input, shape index: {}]
  %s4 = inlined_call_operand.hbm [shape: f32[2,16,128], index: 4, kind: output, shape index: {}]
  %s5 = sld [smem:[#allocation0]]
  $region73: #{tpu_custom_call.1} parent=0
    _
  %s7 = ssub.s32 1, %s5
  %s8 = scalar_select 0, %s7, %s5
  $region1: #{tpu_custom_call.1} parent=0
    #allocation6 [shape = 'u8[8192]{0}', space=vmem, size = 0x2000, scoped, tag = 'input window, operand 0']
    #allocation7 [shape = 's32[2]{0}', space=sflag, size = 0x8, scoped, tag = 'scoped memory for tpu_custom_call.1']
    #allocation8 [shape = 's32[2]{0}', space=sflag, size = 0x8, scoped, tag = 'scoped memory for tpu_custom_call.1']
    #allocation9 [shape = 'u8[8192]{0}', space=vmem, size = 0x2000, scoped, tag = 'input window, operand 1']
    #allocation10 [shape = 's32[2]{0}', space=sflag, size = 0x8, scoped, tag = 'scoped memory for tpu_custom_call.1']
    #allocation11 [shape = 'u8[8192]{0}', space=vmem, size = 0x2000, scoped, tag = 'input window, operand 2']
    #allocation12 [shape = 'u8[8192]{0}', space=vmem, size = 0x2000, scoped, tag = 'input window, operand 3, single buffered']
    #allocation13 [shape = 's32[1]{0}', space=sflag, size = 0x4, scoped, tag = 'scoped memory for tpu_custom_call.1']
    #allocation14 [shape = 'u8[16384]{0}', space=vmem, size = 0x4000, scoped, tag = 'output window, operand 0']
    %9 = vsyncpa [#allocation7], 0
    %s10 = scalar_lea.sflag [#allocation7], 1
    %11 = vsyncpa %s10, 0
    %12 = vsyncpa [#allocation10], 0
    %s13 = scalar_lea.sflag [#allocation10], 1
    %14 = vsyncpa %s13, 0
    %15 = vsyncpa [#allocation13], 0
    %16 = vsyncpa [#allocation8], 0
    %s17 = scalar_lea.sflag [#allocation8], 1
    %18 = vsyncpa %s17, 0
    loop: start=0, step=1, limit=4
    $region2: #{tpu_custom_call.1} parent=1 // loop_pre_header
      _
    $region3: #{tpu_custom_call.1} parent=1 // loop_header
      %s20 = sphi 0, %s24
      %p21 = scmp.ge.s32.totalorder %s20, 4
      %s27 = sphi 0, %s46
      %s28 = sphi 0, %s42
      %s29 = sphi 0, %s38
      %s30 = sphi 0, %s27
      %s31 = sphi 0, %s28
      %s32 = sphi 0, %s29
      %s33 = sphi 0, %s30
      %s34 = sphi 0, %s31
      %s35 = sphi 0, %s32
      %s51 = sphi 0, %s53
      %s54 = sphi 0, %s51
      %s55 = sphi 0, %s54
      %s71 = sphi 0, %s55
      %s79 = sphi 0, %s81
      %s82 = sphi 0, %s79
      %s83 = sphi 0, %s82
      %s99 = sphi 0, %s83
      %s107 = sphi 0, %s109
      %s110 = sphi 0, %s107
      %s111 = sphi 0, %s110
      %s127 = sphi 0, %s111
      %s131 = sphi 0, %s131
      %s133 = sphi 0, %s131
      %s134 = sphi 0, %s133
      %s148 = sphi 0, %s134
      %s156 = sphi 0, %s158
      %s159 = sphi 0, %s156
      %s160 = sphi 0, %s159
      %s176 = sphi 0, %s160
    $region4: #{tpu_custom_call.1} parent=1 // loop_header_branch
      %23 = sbr.rel (%p21) target = $region8
    $region5: #{tpu_custom_call.1} parent=1 // loop_body
      %s25 = ssub.s32 %s20, 1
      %s26 = ssub.s32 %s20, 2
      %s36 = sadd.s32 1, %s29
      %p37 = scmp.ge.s32.totalorder %s36, 1
      %s38 = scalar_select %p37, 0, %s36
      %s39 = sadd.s32 1, %s28
      %s40 = scalar_select %p37, %s39, %s28
      %p41 = scmp.ge.s32.totalorder %s40, 1
      %s42 = scalar_select %p41, 0, %s40
      %s43 = sadd.s32 1, %s27
      %s44 = scalar_select %p41, %s43, %s27
      %p45 = scmp.ge.s32.totalorder %s44, 2
      %s46 = scalar_select %p45, 0, %s44
      %s47 = ssub.s32 %s27, %s46
      %s48 = ssub.s32 %s28, %s42
      %s49 = sor.u32 %s47, %s48
      %p50 = scmp.eq.s32.totalorder %s49, 0
      %s52 = sadd.s32 %s51, 1
      %s53 = scalar_select %p50, %s51, %s52
      %p56 = pneg %p50
      %p57 = scmp.eq.s32.totalorder %s20, 1
      %p58 = por %p56, %p57
      %p59 = scmp.ne.s32.totalorder %s51, %s54
      %p60 = scmp.eq.s32.totalorder %s20, 0
      %p61 = por %p59, %p60
      %p62 = scmp.ne.s32.totalorder %s51, %s54
      %p63 = scmp.eq.s32.totalorder %s25, 1
      %p64 = por %p62, %p63
      %p65 = scmp.ne.s32.totalorder %s54, %s55
      %p66 = scmp.eq.s32.totalorder %s25, 0
      %p67 = por %p65, %p66
      %p68 = scmp.ne.s32.totalorder %s54, %s55
      %p69 = scmp.eq.s32.totalorder %s26, 1
      %p70 = por %p68, %p69
      %p72 = scmp.ne.s32.totalorder %s55, %s71
      %p73 = scmp.eq.s32.totalorder %s26, 0
      %p74 = por %p72, %p73
      %s75 = ssub.s32 %s27, %s46
      %s76 = ssub.s32 %s29, %s38
      %s77 = sor.u32 %s75, %s76
      %p78 = scmp.eq.s32.totalorder %s77, 0
      %s80 = sadd.s32 %s79, 1
      %s81 = scalar_select %p78, %s79, %s80
      %p84 = pneg %p78
      %p85 = scmp.eq.s32.totalorder %s20, 1
      %p86 = por %p84, %p85
      %p87 = scmp.ne.s32.totalorder %s79, %s82
      %p88 = scmp.eq.s32.totalorder %s20, 0
      %p89 = por %p87, %p88
      %p90 = scmp.ne.s32.totalorder %s79, %s82
      %p91 = scmp.eq.s32.totalorder %s25, 1
      %p92 = por %p90, %p91
      %p93 = scmp.ne.s32.totalorder %s82, %s83
      %p94 = scmp.eq.s32.totalorder %s25, 0
      %p95 = por %p93, %p94
      %p96 = scmp.ne.s32.totalorder %s82, %s83
      %p97 = scmp.eq.s32.totalorder %s26, 1
      %p98 = por %p96, %p97
      %p100 = scmp.ne.s32.totalorder %s83, %s99
      %p101 = scmp.eq.s32.totalorder %s26, 0
      %p102 = por %p100, %p101
      %s103 = ssub.s32 %s27, %s46
      %s104 = ssub.s32 %s29, %s38
      %s105 = sor.u32 %s103, %s104
      %p106 = scmp.eq.s32.totalorder %s105, 0
      %s108 = sadd.s32 %s107, 1
      %s109 = scalar_select %p106, %s107, %s108
      %p112 = pneg %p106
      %p113 = scmp.eq.s32.totalorder %s20, 1
      %p114 = por %p112, %p113
      %p115 = scmp.ne.s32.totalorder %s107, %s110
      %p116 = scmp.eq.s32.totalorder %s20, 0
      %p117 = por %p115, %p116
      %p118 = scmp.ne.s32.totalorder %s107, %s110
      %p119 = scmp.eq.s32.totalorder %s25, 1
      %p120 = por %p118, %p119
      %p121 = scmp.ne.s32.totalorder %s110, %s111
      %p122 = scmp.eq.s32.totalorder %s25, 0
      %p123 = por %p121, %p122
      %p124 = scmp.ne.s32.totalorder %s110, %s111
      %p125 = scmp.eq.s32.totalorder %s26, 1
      %p126 = por %p124, %p125
      %p128 = scmp.ne.s32.totalorder %s111, %s127
      %p129 = scmp.eq.s32.totalorder %s26, 0
      %p130 = por %p128, %p129
      %s132 = sadd.s32 %s131, 1
      %p135 = scmp.eq.s32.totalorder %s20, 1
      %p136 = scmp.ne.s32.totalorder %s131, %s133
      %p137 = scmp.eq.s32.totalorder %s20, 0
      %p138 = por %p136, %p137
      %p139 = scmp.ne.s32.totalorder %s131, %s133
      %p140 = scmp.eq.s32.totalorder %s25, 1
      %p141 = por %p139, %p140
      %p142 = scmp.ne.s32.totalorder %s133, %s134
      %p143 = scmp.eq.s32.totalorder %s25, 0
      %p144 = por %p142, %p143
      %p145 = scmp.ne.s32.totalorder %s133, %s134
      %p146 = scmp.eq.s32.totalorder %s26, 1
      %p147 = por %p145, %p146
      %p149 = scmp.ne.s32.totalorder %s134, %s148
      %p150 = scmp.eq.s32.totalorder %s26, 0
      %p151 = por %p149, %p150
      %s152 = ssub.s32 %s27, %s46
      %s153 = ssub.s32 %s28, %s42
      %s154 = sor.u32 %s152, %s153
      %p155 = scmp.eq.s32.totalorder %s154, 0
      %s157 = sadd.s32 %s156, 1
      %s158 = scalar_select %p155, %s156, %s157
      %p161 = pneg %p155
      %p162 = scmp.eq.s32.totalorder %s20, 1
      %p163 = por %p161, %p162
      %p164 = scmp.ne.s32.totalorder %s156, %s159
      %p165 = scmp.eq.s32.totalorder %s20, 0
      %p166 = por %p164, %p165
      %p167 = scmp.ne.s32.totalorder %s156, %s159
      %p168 = scmp.eq.s32.totalorder %s25, 1
      %p169 = por %p167, %p168
      %p170 = scmp.ne.s32.totalorder %s159, %s160
      %p171 = scmp.eq.s32.totalorder %s25, 0
      %p172 = por %p170, %p171
      %p173 = scmp.ne.s32.totalorder %s159, %s160
      %p174 = scmp.eq.s32.totalorder %s26, 1
      %p175 = por %p173, %p174
      %p177 = scmp.ne.s32.totalorder %s160, %s176
      %p178 = scmp.eq.s32.totalorder %s26, 0
      %p179 = por %p177, %p178
      %p180 = scmp.le.s32.totalorder 1, %s20
      %p181 = scmp.lt.s32.totalorder %s20, 3
      %p182 = pnand %p180, %p181
      %p183 = pneg %p182
      // Predicated region
      $region9: #{tpu_custom_call.1} parent=5 // pred_check
        _
      $region10: #{tpu_custom_call.1} parent=5 // pred_check_branch
        %185 = sbr.rel (%p182) target = $region12
      $region11: #{tpu_custom_call.1} parent=5 // pred_region
        %s186 = ssub.s32 %s20, 1
        // Predicated region
        $region13: #{tpu_custom_call.1} parent=11 // pred_check
          %p187 = pneg %p144
        $region14: #{tpu_custom_call.1} parent=11 // pred_check_branch
          %189 = sbr.rel (%p187) target = $region16
        $region15: #{tpu_custom_call.1} parent=11 // pred_region
          %s191 = ssub.s32 256, 256
          %192 = vsyncadd [#allocation13], %s191
          %s193 = sshll.u32 [#allocation12], 4
          %s194 = int_to_ptr.vmem [resolvable:$true] %s193
          %199 = dma.hbm_to_vmem [thread:$0]  %s3, 256, %s194, [#allocation13], 64, 64, 4
        $region16: #{tpu_custom_call.1} parent=11 // pred_fallthru
          _
      $region12: #{tpu_custom_call.1} parent=5 // pred_fallthru
        _
      %p200 = scmp.lt.s32.totalorder %s20, 2
      // Predicated region
      $region17: #{tpu_custom_call.1} parent=5 // pred_check
        %p201 = pneg %p200
      $region18: #{tpu_custom_call.1} parent=5 // pred_check_branch
        %203 = sbr.rel (%p201) target = $region20
      $region19: #{tpu_custom_call.1} parent=5 // pred_region
        // Predicated region
        $region21: #{tpu_custom_call.1} parent=19 // pred_check
          %p204 = pneg %p61
        $region22: #{tpu_custom_call.1} parent=19 // pred_check_branch
          %206 = sbr.rel (%p204) target = $region24
        $region23: #{tpu_custom_call.1} parent=19 // pred_region
          %s207 = sand.u32 %s51, 1
          %s208 = scalar_lea.sflag [#allocation7], %s207
          %s209 = sand.u32 %s51, 1
          %s210 = smul.addr %s209, 8
          %s211 = scalar_lea.vmem [#allocation6], %s210
          %s212 = smul.u32 2, %s28
          %s214 = ssub.s32 128, 128
          %215 = vsyncadd %s208, %s214
          %s216 = smul.addr %s27, 2
          %s217 = sadd.s32 %s212, %s216
          %s218 = smul.addr %s217, 64
          %s219 = scalar_lea.hbm %s0, %s218
          %s220 = sshll.u32 %s211, 4
          %s221 = int_to_ptr.vmem [resolvable:$true] %s220
          %226 = dma.hbm_to_vmem [thread:$0]  %s219, 128, %s221, %s208, 64, 64, 4
        $region24: #{tpu_custom_call.1} parent=19 // pred_fallthru
          _
        // Predicated region
        $region25: #{tpu_custom_call.1} parent=19 // pred_check
          %p227 = pneg %p89
        $region26: #{tpu_custom_call.1} parent=19 // pred_check_branch
          %229 = sbr.rel (%p227) target = $region28
        $region27: #{tpu_custom_call.1} parent=19 // pred_region
          %s230 = sand.u32 %s20, 1
          %s231 = scalar_lea.sflag [#allocation10], %s230
          %s232 = sand.u32 %s79, 1
          %s233 = smul.addr %s232, 8
          %s234 = scalar_lea.vmem [#allocation9], %s233
          %s235 = smul.u32 2, %s29
          %s237 = ssub.s32 128, 128
          %238 = vsyncadd %s231, %s237
          %s239 = smul.addr %s27, 2
          %s240 = sadd.s32 %s235, %s239
          %s241 = smul.addr %s240, 64
          %s242 = scalar_lea.hbm %s1, %s241
          %s243 = sshll.u32 %s234, 4
          %s244 = int_to_ptr.vmem [resolvable:$true] %s243
          %249 = dma.hbm_to_vmem [thread:$0]  %s242, 128, %s244, %s231, 64, 64, 4
        $region28: #{tpu_custom_call.1} parent=19 // pred_fallthru
          _
        // Predicated region
        $region29: #{tpu_custom_call.1} parent=19 // pred_check
          %p250 = pneg %p117
        $region30: #{tpu_custom_call.1} parent=19 // pred_check_branch
          %252 = sbr.rel (%p250) target = $region32
        $region31: #{tpu_custom_call.1} parent=19 // pred_region
          %s253 = sand.u32 %s20, 1
          %s254 = scalar_lea.sflag [#allocation10], %s253
          %s255 = sand.u32 %s107, 1
          %s256 = smul.addr %s255, 8
          %s257 = scalar_lea.vmem [#allocation11], %s256
          %s258 = smul.u32 2, %s29
          %s260 = ssub.s32 128, 128
          %261 = vsyncadd %s254, %s260
          %s262 = smul.addr %s27, 2
          %s263 = sadd.s32 %s258, %s262
          %s264 = smul.addr %s263, 64
          %s265 = scalar_lea.hbm %s2, %s264
          %s266 = sshll.u32 %s257, 4
          %s267 = int_to_ptr.vmem [resolvable:$true] %s266
          %272 = dma.hbm_to_vmem [thread:$0]  %s265, 128, %s267, %s254, 64, 64, 4
        $region32: #{tpu_custom_call.1} parent=19 // pred_fallthru
          _
      $region20: #{tpu_custom_call.1} parent=5 // pred_fallthru
        _
      %p273 = scmp.le.s32.totalorder 1, %s20
      %p274 = scmp.lt.s32.totalorder %s20, 3
      %p275 = pnand %p273, %p274
      %p276 = pneg %p275
      // Predicated region
      $region33: #{tpu_custom_call.1} parent=5 // pred_check
        _
      $region34: #{tpu_custom_call.1} parent=5 // pred_check_branch
        %278 = sbr.rel (%p275) target = $region36
      $region35: #{tpu_custom_call.1} parent=5 // pred_region
        %s279 = ssub.s32 %s20, 1
        %s280 = sand.u32 %s54, 1
        %s281 = scalar_lea.sflag [#allocation7], %s280
        %s282 = sand.u32 %s54, 1
        %s283 = smul.addr %s282, 8
        %s284 = scalar_lea.vmem [#allocation6], %s283
        // Predicated region
        $region37: #{tpu_custom_call.1} parent=35 // pred_check
          %p285 = pneg %p67
        $region38: #{tpu_custom_call.1} parent=35 // pred_check_branch
          %287 = sbr.rel (%p285) target = $region40
        $region39: #{tpu_custom_call.1} parent=35 // pred_region
          %288 = dma.done %s281, 128
        $region40: #{tpu_custom_call.1} parent=35 // pred_fallthru
          _
        %s289 = sand.u32 %s25, 1
        %s290 = scalar_lea.sflag [#allocation10], %s289
        %s291 = sand.u32 %s82, 1
        %s292 = smul.addr %s291, 8
        %s293 = scalar_lea.vmem [#allocation9], %s292
        // Predicated region
        $region41: #{tpu_custom_call.1} parent=35 // pred_check
          %p294 = pneg %p95
        $region42: #{tpu_custom_call.1} parent=35 // pred_check_branch
          %296 = sbr.rel (%p294) target = $region44
        $region43: #{tpu_custom_call.1} parent=35 // pred_region
          %297 = dma.done %s290, 128
        $region44: #{tpu_custom_call.1} parent=35 // pred_fallthru
          _
        %s298 = sand.u32 %s25, 1
        %s299 = scalar_lea.sflag [#allocation10], %s298
        %s300 = sand.u32 %s110, 1
        %s301 = smul.addr %s300, 8
        %s302 = scalar_lea.vmem [#allocation11], %s301
        // Predicated region
        $region45: #{tpu_custom_call.1} parent=35 // pred_check
          %p303 = pneg %p123
        $region46: #{tpu_custom_call.1} parent=35 // pred_check_branch
          %305 = sbr.rel (%p303) target = $region48
        $region47: #{tpu_custom_call.1} parent=35 // pred_region
          %306 = dma.done %s299, 128
        $region48: #{tpu_custom_call.1} parent=35 // pred_fallthru
          _
        // Predicated region
        $region49: #{tpu_custom_call.1} parent=35 // pred_check
          %p307 = pneg %p144
        $region50: #{tpu_custom_call.1} parent=35 // pred_check_branch
          %309 = sbr.rel (%p307) target = $region52
        $region51: #{tpu_custom_call.1} parent=35 // pred_region
          %310 = dma.done [#allocation13], 256
        $region52: #{tpu_custom_call.1} parent=35 // pred_fallthru
          _
        %s311 = sand.u32 %s54, 1
        %s312 = scalar_lea.sflag [#allocation7], %s311
        %s313 = sand.u32 %s54, 1
        %s314 = smul.addr %s313, 8
        %s315 = scalar_lea.vmem [#allocation6], %s314
        %p316 = pneg %p67
        %p317 = pneg %p64
        %s318 = sand.u32 %s25, 1
        %s319 = scalar_lea.sflag [#allocation10], %s318
        %s320 = sand.u32 %s82, 1
        %s321 = smul.addr %s320, 8
        %s322 = scalar_lea.vmem [#allocation9], %s321
        %p323 = pneg %p95
        %p324 = pneg %p92
        %s325 = sand.u32 %s25, 1
        %s326 = scalar_lea.sflag [#allocation10], %s325
        %s327 = sand.u32 %s110, 1
        %s328 = smul.addr %s327, 8
        %s329 = scalar_lea.vmem [#allocation11], %s328
        %p330 = pneg %p123
        %p331 = pneg %p120
        %p332 = pneg %p144
        %p333 = pneg %p141
        %p334 = pneg %p172
        %p335 = pneg %p169
        %s336 = sand.u32 %s159, 1
        %s337 = scalar_lea.sflag [#allocation8], %s336
        %s338 = sand.u32 %s159, 1
        %s339 = smul.addr %s338, 16
        %s340 = scalar_lea.vmem [#allocation14], %s339
        %s341 = smul.u32 2, %s31
        %s342 = smul.u32 2, %s32
        %s343 = smul.u32 2, %s32
        %s344 = smul.u32 2, %s31
        %p346 = scmp.eq.s32.totalorder %s32, 0
        // Predicated region
        $region53: #{tpu_custom_call.1} parent=35 // pred_check
          %p347 = pneg %p346
        $region54: #{tpu_custom_call.1} parent=35 // pred_check_branch
          %349 = sbr.rel (%p347) target = $region56
        $region55: #{tpu_custom_call.1} parent=35 // pred_region
          %v350 = vld [vmem:[%s284] sm:$0xf]
          %v351 = vld [vmem:[%s284 + $0x4] sm:$0xf]
          %v352 = vld [vmem:[#allocation12] sm:$0xf]
          %v353 = vld [vmem:[#allocation12 + $0x4] sm:$0xf]
          %v354 = vld [vmem:[#allocation12 + $0x8] sm:$0xf]
          %v355 = vld [vmem:[#allocation12 + $0xc] sm:$0xf]
          %v358 = vunpack.c.l.b16 %v350
          %v359 = vunpack.c.l.b16 %v351
          %v360 = vpack.c.b16 %v359, %v358
          %v365 = vunpack.c.l.b16 %v352
          %v366 = vunpack.c.l.b16 %v353
          %v367 = vunpack.c.l.b16 %v354
          %v368 = vunpack.c.l.b16 %v355
          %v369 = vpack.c.b16 %v366, %v365
          %v370 = vpack.c.b16 %v368, %v367
          %vm373 = vcmask 261120
          %v375 = vsel %vm373, %v360, 0
          %377 = vmatprep.subr.bf16.mxu0 0
          %378 = vmatpush1.bf16.msra.mxu0 %v369
          %379 = vmatprep.subr.bf16.mxu0 0
          %380 = vmatpush1.bf16.msra.mxu0 %v370
          %381 = vmatprep.subr.bf16.mxu0 0
          %382 = vmatpush1.bf16.msra.mxu0 0
          %383 = vmatprep.subr.bf16.mxu0 0
          %384 = vmatpush1.bf16.msra.mxu0 0
          %385 = vmatprep.subr.bf16.mxu0 0
          %386 = vmatpush1.bf16.msra.mxu0 0
          %387 = vmatprep.subr.bf16.mxu0 0
          %388 = vmatpush1.bf16.msra.mxu0 0
          %389 = vmatprep.subr.bf16.mxu0 0
          %390 = vmatpush1.bf16.msra.mxu0 0
          %391 = vmatprep.subr.bf16.mxu0 0
          %392 = vmatpush1.bf16.msra.mxu0 0
          %393 = vmatprep.subr.bf16.mxu0 0
          %394 = vmatpush1.bf16.msra.mxu0 0
          %395 = vmatprep.subr.bf16.mxu0 0
          %396 = vmatpush1.bf16.msra.mxu0 0
          %397 = vmatprep.subr.bf16.mxu0 0
          %398 = vmatpush1.bf16.msra.mxu0 0
          %399 = vmatprep.subr.bf16.mxu0 0
          %400 = vmatpush1.bf16.msra.mxu0 0
          %401 = vmatprep.subr.bf16.mxu0 0
          %402 = vmatpush1.bf16.msra.mxu0 0
          %403 = vmatprep.subr.bf16.mxu0 0
          %404 = vmatpush1.bf16.msra.mxu0 0
          %405 = vmatprep.subr.bf16.mxu0 0
          %406 = vmatpush1.bf16.msra.mxu0 0
          %407 = vmatprep.subr.bf16.mxu0 0
          %408 = vmatpush1.bf16.msra.mxu0 0
          %409 = vmatprep.mubr.bf16.mxu0 0
          %410 = vmatmul.mubr.bf16.gmra.mrb[0].mxu0 %v375
          %v411 = vpop.f32.mrb[0].mxu0
          %v412 = vadd.f32 0.0, %v411
          %v413 = vpop.f32.mrb[0].mxu0
          %v414 = vpop.f32.mrb[0].mxu0
          %v415 = vadd.f32 0.0, %v414
          %v416 = vpop.f32.mrb[0].mxu0
          %417 = vdwg.mxu0
          %v418 = vpack.c.bf16 %v415, %v412
          %419 = vst [vmem:[#allocation2] sm:$0xff] %v418
          %vm420 = vcmask 7168
          %421 = vst.msk [vmem:[#allocation3] sm:$0xff] %vm420, -inf
          %422 = vst.msk [vmem:[#allocation3 + $0x8] sm:$0xff] %vm420, -inf
          %423 = vst.msk [vmem:[#allocation4] sm:$0xff] %vm420, 0.0
          %424 = vst.msk [vmem:[#allocation4 + $0x8] sm:$0xff] %vm420, 0.0
          %425 = vst [vmem:[#allocation5] sm:$0xff] 0.0
          %426 = vst [vmem:[#allocation5 + $0x8] sm:$0xff] 0.0
        $region56: #{tpu_custom_call.1} parent=35 // pred_fallthru
          _
        %v427 = vld [vmem:[#allocation2] sm:$0xff]
        %v428 = vld [vmem:[%s293] sm:$0xf]
        %v429 = vld [vmem:[%s293 + $0x4] sm:$0xf]
        %v432 = vunpack.c.l.b16 %v428
        %v433 = vunpack.c.l.b16 %v429
        %v434 = vpack.c.b16 %v433, %v432
        %436 = vmatprep.subr.bf16.mxu0 0
        %437 = vmatpush1.bf16.xpose.msra.mxu0 %v434
        %438 = vmatprep.subr.bf16.mxu0 0
        %439 = vmatpush1.bf16.xpose.msra.mxu0 0
        %440 = vmatprep.subr.bf16.mxu0 0
        %441 = vmatpush1.bf16.xpose.msra.mxu0 0
        %442 = vmatprep.subr.bf16.mxu0 0
        %443 = vmatpush1.bf16.xpose.msra.mxu0 0
        %444 = vmatprep.subr.bf16.mxu0 0
        %445 = vmatpush1.bf16.xpose.msra.mxu0 0
        %446 = vmatprep.subr.bf16.mxu0 0
        %447 = vmatpush1.bf16.xpose.msra.mxu0 0
        %448 = vmatprep.subr.bf16.mxu0 0
        %449 = vmatpush1.bf16.xpose.msra.mxu0 0
        %450 = vmatprep.subr.bf16.mxu0 0
        %451 = vmatpush1.bf16.xpose.msra.mxu0 0
        %452 = vmatprep.subr.bf16.mxu0 0
        %453 = vmatpush1.bf16.xpose.msra.mxu0 0
        %454 = vmatprep.subr.bf16.mxu0 0
        %455 = vmatpush1.bf16.xpose.msra.mxu0 0
        %456 = vmatprep.subr.bf16.mxu0 0
        %457 = vmatpush1.bf16.xpose.msra.mxu0 0
        %458 = vmatprep.subr.bf16.mxu0 0
        %459 = vmatpush1.bf16.xpose.msra.mxu0 0
        %460 = vmatprep.subr.bf16.mxu0 0
        %461 = vmatpush1.bf16.xpose.msra.mxu0 0
        %462 = vmatprep.subr.bf16.mxu0 0
        %463 = vmatpush1.bf16.xpose.msra.mxu0 0
        %464 = vmatprep.subr.bf16.mxu0 0
        %465 = vmatpush1.bf16.xpose.msra.mxu0 0
        %466 = vmatprep.subr.bf16.mxu0 0
        %467 = vmatpush1.bf16.xpose.msra.mxu0 0
        %468 = vmatprep.mubr.bf16.mxu0 0
        %469 = vmatmul.mubr.bf16.gmra.mrb[0].mxu0 %v427
        %v470 = vpop.f32.mrb[0].mxu0
        %v471 = vadd.f32 0.0, %v470
        %v472 = vpop.f32.mrb[0].mxu0
        %v473 = vpop.f32.mrb[0].mxu0
        %v474 = vadd.f32 0.0, %v473
        %v475 = vpop.f32.mrb[0].mxu0
        %476 = vdwg.mxu0
        %v477 = vlaneseq
        %v478 = vand.u32 %v477, 127
        %s479 = smul.u32 %s32, 16
        %v480 = vstv %s479
        %v481 = vadd.s32 %v478, %v480
        %vm482 = vcmp.lt.s32.totalorder %v481, 8
        %v483 = vsel %vm482, %v471, -inf
        %v484 = vsel %vm482, %v474, -inf
        %v485 = vld [vmem:[#allocation3] sm:$0xff]
        %v486 = vld [vmem:[#allocation3 + $0x8] sm:$0xff]
        %vm487 = vcmask 130048
        %v488 = vsel %vm487, %v483, -inf
        %489 = vmax.xlane.f32.xlu0 %v488
        %v490 = vpop.xlane.xlu0 %489
        %v491 = vsel %vm487, %v484, -inf
        %492 = vmax.xlane.f32.xlu0 %v491
        %v493 = vpop.xlane.xlu0 %492
        %v494 = vmax.f32 %v485, %v490
        %v495 = vmax.f32 %v486, %v493
        %v496 = vsub.f32 %v485, %v494
        %v497 = vsub.f32 %v486, %v495
        %v498 = vmul.f32 %v496, 1.442695
        %v499 = vpow.pop %v498
        %v500 = vmul.f32 %v497, 1.442695
        %v501 = vpow.pop %v500
        %503 = vset.pattern.permute.xlu0 0
        %504 = vperm.xlu0 %503, %v494
        %v505 = vpop.permute.xlu0 %504
        %508 = vset.pattern.permute.xlu0 0
        %509 = vperm.xlu0 %508, %v495
        %v510 = vpop.permute.xlu0 %509
        %v512 = vsub.f32 %v483, %v505
        %v513 = vsub.f32 %v484, %v510
        %v514 = vmul.f32 %v512, 1.442695
        %v515 = vpow.pop %v514
        %v516 = vmul.f32 %v513, 1.442695
        %v517 = vpow.pop %v516
        %v518 = vld [vmem:[#allocation4] sm:$0xff]
        %v519 = vld [vmem:[#allocation4 + $0x8] sm:$0xff]
        %v520 = vmul.f32 %v499, %v518
        %v521 = vmul.f32 %v501, %v519
        %v522 = vsel %vm487, %v515, 0.0
        %523 = vadd.xlane.f32.xlu0 %v522
        %v524 = vpop.xlane.xlu0 %523
        %v525 = vsel %vm487, %v517, 0.0
        %526 = vadd.xlane.f32.xlu0 %v525
        %v527 = vpop.xlane.xlu0 %526
        %v528 = vadd.f32 %v520, %v524
        %v529 = vadd.f32 %v521, %v527
        %vm530 = vcmask 7168
        %531 = vst.msk [vmem:[#allocation4] sm:$0xff] %vm530, %v528
        %532 = vst.msk [vmem:[#allocation4 + $0x8] sm:$0xff] %vm530, %v529
        %v533 = vld [vmem:[#allocation5] sm:$0xff]
        %v534 = vld [vmem:[#allocation5 + $0x8] sm:$0xff]
        %536 = vset.pattern.permute.xlu0 0
        %537 = vperm.xlu0 %536, %v499
        %v538 = vpop.permute.xlu0 %537
        %541 = vset.pattern.permute.xlu0 0
        %542 = vperm.xlu0 %541, %v501
        %v543 = vpop.permute.xlu0 %542
        %v545 = vmul.f32 %v538, %v533
        %v546 = vmul.f32 %v543, %v534
        %v547 = vpack.c.bf16 %v517, %v515
        %v548 = vld [vmem:[%s302] sm:$0xf]
        %v549 = vld [vmem:[%s302 + $0x4] sm:$0xf]
        %v552 = vunpack.c.l.b16 %v548
        %v553 = vunpack.c.l.b16 %v549
        %v554 = vpack.c.b16 %v553, %v552
        %v557 = vsel %vm487, %v547, 0
        %559 = vmatprep.subr.bf16.mxu0 0
        %560 = vmatpush1.bf16.msra.mxu0 %v554
        %561 = vmatprep.subr.bf16.mxu0 0
        %562 = vmatpush1.bf16.msra.mxu0 0
        %563 = vmatprep.subr.bf16.mxu0 0
        %564 = vmatpush1.bf16.msra.mxu0 0
        %565 = vmatprep.subr.bf16.mxu0 0
        %566 = vmatpush1.bf16.msra.mxu0 0
        %567 = vmatprep.subr.bf16.mxu0 0
        %568 = vmatpush1.bf16.msra.mxu0 0
        %569 = vmatprep.subr.bf16.mxu0 0
        %570 = vmatpush1.bf16.msra.mxu0 0
        %571 = vmatprep.subr.bf16.mxu0 0
        %572 = vmatpush1.bf16.msra.mxu0 0
        %573 = vmatprep.subr.bf16.mxu0 0
        %574 = vmatpush1.bf16.msra.mxu0 0
        %575 = vmatprep.subr.bf16.mxu0 0
        %576 = vmatpush1.bf16.msra.mxu0 0
        %577 = vmatprep.subr.bf16.mxu0 0
        %578 = vmatpush1.bf16.msra.mxu0 0
        %579 = vmatprep.subr.bf16.mxu0 0
        %580 = vmatpush1.bf16.msra.mxu0 0
        %581 = vmatprep.subr.bf16.mxu0 0
        %582 = vmatpush1.bf16.msra.mxu0 0
        %583 = vmatprep.subr.bf16.mxu0 0
        %584 = vmatpush1.bf16.msra.mxu0 0
        %585 = vmatprep.subr.bf16.mxu0 0
        %586 = vmatpush1.bf16.msra.mxu0 0
        %587 = vmatprep.subr.bf16.mxu0 0
        %588 = vmatpush1.bf16.msra.mxu0 0
        %589 = vmatprep.subr.bf16.mxu0 0
        %590 = vmatpush1.bf16.msra.mxu0 0
        %591 = vmatprep.mubr.bf16.mxu0 0
        %592 = vmatmul.mubr.bf16.gmra.mrb[0].mxu0 %v557
        %v593 = vpop.f32.mrb[0].mxu0
        %v594 = vadd.f32 0.0, %v593
        %v595 = vpop.f32.mrb[0].mxu0
        %v596 = vpop.f32.mrb[0].mxu0
        %v597 = vadd.f32 0.0, %v596
        %v598 = vpop.f32.mrb[0].mxu0
        %599 = vdwg.mxu0
        %v600 = vadd.f32 %v545, %v594
        %v601 = vadd.f32 %v546, %v597
        %602 = vst [vmem:[#allocation5] sm:$0xff] %v600
        %603 = vst [vmem:[#allocation5 + $0x8] sm:$0xff] %v601
        %604 = vst.msk [vmem:[#allocation3] sm:$0xff] %vm530, %v494
        %605 = vst.msk [vmem:[#allocation3 + $0x8] sm:$0xff] %vm530, %v495
        // Predicated region
        $region57: #{tpu_custom_call.1} parent=35 // pred_check
          %p606 = pneg %p346
        $region58: #{tpu_custom_call.1} parent=35 // pred_check_branch
          %608 = sbr.rel (%p606) target = $region60
        $region59: #{tpu_custom_call.1} parent=35 // pred_region
          %v609 = vld [vmem:[#allocation4] sm:$0xff]
          %v610 = vld [vmem:[#allocation4 + $0x8] sm:$0xff]
          %v611 = vrcp.pop %v609
          %v612 = vrcp.pop %v610
          %v613 = vld [vmem:[#allocation5] sm:$0xff]
          %v614 = vld [vmem:[#allocation5 + $0x8] sm:$0xff]
          %616 = vset.pattern.permute.xlu0 0
          %617 = vperm.xlu0 %616, %v611
          %v618 = vpop.permute.xlu0 %617
          %621 = vset.pattern.permute.xlu0 0
          %622 = vperm.xlu0 %621, %v612
          %v623 = vpop.permute.xlu0 %622
          %v625 = vmul.f32 %v613, %v618
          %v626 = vmul.f32 %v614, %v623
          %627 = vst [vmem:[%s340] sm:$0xff] %v625
          %628 = vst [vmem:[%s340 + $0x8] sm:$0xff] %v626
        $region60: #{tpu_custom_call.1} parent=35 // pred_fallthru
          _
        %s629 = sand.u32 %s159, 1
        %s630 = scalar_lea.sflag [#allocation8], %s629
        %s631 = sand.u32 %s159, 1
        %s632 = smul.addr %s631, 16
        %s633 = scalar_lea.vmem [#allocation14], %s632
        // Predicated region
        $region61: #{tpu_custom_call.1} parent=35 // pred_check
          %p634 = pneg %p169
        $region62: #{tpu_custom_call.1} parent=35 // pred_check_branch
          %636 = sbr.rel (%p634) target = $region64
        $region63: #{tpu_custom_call.1} parent=35 // pred_region
          %s637 = smul.u32 2, %s31
          %s639 = ssub.s32 256, 256
          %640 = vsyncadd %s630, %s639
          %s641 = smul.addr %s30, 2
          %s642 = sadd.s32 %s637, %s641
          %s643 = smul.addr %s642, 128
          %s644 = scalar_lea.hbm %s4, %s643
          %s645 = sshll.u32 %s633, 4
          %s646 = int_to_ptr.vmem [resolvable:$true] %s645
          %651 = dma.vmem_to_hbm [thread:$0]  %s646, 256, %s644, %s630, 128, 128, 8
        $region64: #{tpu_custom_call.1} parent=35 // pred_fallthru
          _
      $region36: #{tpu_custom_call.1} parent=5 // pred_fallthru
        _
      %p652 = scmp.le.s32.totalorder 2, %s20
      // Predicated region
      $region65: #{tpu_custom_call.1} parent=5 // pred_check
        %p653 = pneg %p652
      $region66: #{tpu_custom_call.1} parent=5 // pred_check_branch
        %655 = sbr.rel (%p653) target = $region68
      $region67: #{tpu_custom_call.1} parent=5 // pred_region
        %s656 = ssub.s32 %s20, 2
        // Predicated region
        $region69: #{tpu_custom_call.1} parent=67 // pred_check
          %p657 = pneg %p175
        $region70: #{tpu_custom_call.1} parent=67 // pred_check_branch
          %659 = sbr.rel (%p657) target = $region72
        $region71: #{tpu_custom_call.1} parent=67 // pred_region
          %s660 = sand.u32 %s160, 1
          %s661 = scalar_lea.sflag [#allocation8], %s660
          %s662 = sand.u32 %s160, 1
          %s663 = smul.addr %s662, 16
          %s664 = scalar_lea.vmem [#allocation14], %s663
          %665 = dma.done %s661, 256
        $region72: #{tpu_custom_call.1} parent=67 // pred_fallthru
          _
      $region68: #{tpu_custom_call.1} parent=5 // pred_fallthru
        _
    $region6: #{tpu_custom_call.1} parent=1 // loop_footer
      %s24 = sadd.s32 1, %s20
    $region7: #{tpu_custom_call.1} parent=1 // loop_footer_branch
      %19 = sbr.rel target = $region3
    $region8: #{tpu_custom_call.1} parent=1 // loop_exit
      _
    %666 = vsyncpa [#allocation7], 1
    %s667 = scalar_lea.sflag [#allocation7], 1
    %668 = vsyncpa %s667, 1
    %669 = vsyncpa [#allocation10], 1
    %s670 = scalar_lea.sflag [#allocation10], 1
    %671 = vsyncpa %s670, 1
    %672 = vsyncpa [#allocation13], 1
    %673 = vsyncpa [#allocation8], 1
    %s674 = scalar_lea.sflag [#allocation8], 1
    %675 = vsyncpa %s674, 1

</llo_original>
